<compile_context>
chip_gen: v5e
topology: v5e:2x2
jax: 0.10.0
libtpu: 0.0.40
codegen_flags: <defaults>
</compile_context>

<pallas_src>
import jax
import jax.numpy as jnp
from jax.experimental import pallas as pl
from jax.experimental.pallas import tpu as pltpu

# Target for the double-buffered doc-hiddens tile; comfortably fits every
# generation (v7x has 64 MiB physical VMEM).
_DOC_TILE_VMEM_BUDGET = 32 * 1024 * 1024
_VMEM_LIMIT_BYTES = 48 * 1024 * 1024


def _docqa_kernel(x_ref, wy_ref, mask_ref, out_ref):
    """Fused start/end bilinear attention + masked softmax.

    x_ref    : (tb, L, Hd)  doc hiddens in native layout
    wy_ref   : (tb, 2, Hd)  precomputed [W_start@y + b_start ; W_end@y + b_end]
    mask_ref : (tb, 1, L)   int32, 1 = padding
    out_ref  : (tb, 2, L)   softmax probs, [:,0,:]=start, [:,1,:]=end
    """
    x = x_ref[...]                                   # (tb, L, Hd)
    wy = wy_ref[...]                                 # (tb, 2, Hd)
    pad = mask_ref[...] != 0                         # (tb, 1, L)

    # One MXU pass per batch row covers both heads (contract last dims).
    s = jnp.einsum('bkh,blh->bkl', wy, x,
                   preferred_element_type=jnp.float32)   # (tb, 2, L)
    s = jnp.where(pad, -jnp.inf, s)                  # masked_fill(-inf) semantics
    s = s - jnp.max(s, axis=-1, keepdims=True)
    e = jnp.exp(s)
    p = e / jnp.sum(e, axis=-1, keepdims=True)       # exact divide (EUP/VALU slack)
    out_ref[...] = p.astype(out_ref.dtype)


def _choose_block_b(B, L, Hd, itemsize, budget_bytes=_DOC_TILE_VMEM_BUDGET):
    """Pick a batch tile that (a) keeps the double-buffered doc tile within the
    VMEM budget and (b) divides B exactly, so the big tensor is never padded."""
    per_row = 2 * L * Hd * itemsize                  # double-buffered bytes / row
    cap = max(1, int(budget_bytes) // max(int(per_row), 1))
    if B <= cap:
        # Whole batch fits in one step.  Split into two (still x8-aligned)
        # steps when the batch is big enough, so v7x's 2nd TensorCore has work.
        if B >= 16 and B % 16 == 0:
            return B // 2
        return B
    # Largest sublane-aligned (multiple-of-8) tile that divides B.
    tb = (cap // 8) * 8
    while tb >= 8 and B % tb:
        tb -= 8
    if tb >= 8:
        return tb
    # Fallback: any divisor of B within budget (small operands stay legal
    # because every BlockSpec's trailing dims equal the full array dims).
    for d in range(min(cap, B), 0, -1):
        if B % d == 0:
            return d
    return 1


def docqa_forward(doc_hiddens, question_hidden, x1_mask,
                  w_start, b_start, w_end, b_end, *, block_b=None):
    """Eval-mode DocQA forward: (start_scores, end_scores), each (B, L) f32."""
    B, L, Hd = doc_hiddens.shape
    itemsize = jnp.dtype(doc_hiddens.dtype).itemsize
    tb = block_b if block_b is not None else _choose_block_b(B, L, Hd, itemsize)
    assert B % tb == 0, "batch tile must divide B (chosen automatically)"

    # --- Hoist the two Linear layers: one (B, Hq) x (Hq, 2*Hd) XLA matmul. ---
    w_both = jnp.concatenate([w_start, w_end], axis=0)                 # (2*Hd, Hq)
    b_both = jnp.concatenate([b_start, b_end], axis=0)                 # (2*Hd,)
    wy = question_hidden.astype(jnp.float32) @ w_both.T.astype(jnp.float32)
    wy = (wy + b_both).reshape(B, 2, Hd).astype(doc_hiddens.dtype)     # (B, 2, Hd)

    # Small mask reshaped to (B, 1, L) so its trailing dims equal the full
    # array dims for any batch tile (no (8,128) constraint, no padding).
    mask = x1_mask.astype(jnp.int32)[:, None, :]                       # (B, 1, L)

    out = pl.pallas_call(
        _docqa_kernel,
        out_shape=jax.ShapeDtypeStruct((B, 2, L), jnp.float32),
        grid_spec=pltpu.PrefetchScalarGridSpec(
            num_scalar_prefetch=0,
            grid=(B // tb,),
            in_specs=[
                pl.BlockSpec((tb, L, Hd), lambda b: (b, 0, 0)),   # doc hiddens
                pl.BlockSpec((tb, 2, Hd), lambda b: (b, 0, 0)),   # Wy (both heads)
                pl.BlockSpec((tb, 1, L),  lambda b: (b, 0, 0)),   # mask
            ],
            out_specs=pl.BlockSpec((tb, 2, L), lambda b: (b, 0, 0)),
        ),
        compiler_params=pltpu.CompilerParams(
            dimension_semantics=("parallel",),
            vmem_limit_bytes=_VMEM_LIMIT_BYTES,
        ),
    )(doc_hiddens, wy, mask)

    return out[:, 0, :], out[:, 1, :]


def _reference(doc_hiddens, question_hidden, x1_mask, w, b):
    wy = question_hidden @ w.T + b                       # (B, Hd)
    s = jnp.einsum('blh,bh->bl', doc_hiddens, wy)        # (B, L)
    s = jnp.where(x1_mask != 0, -jnp.inf, s)
    return jax.nn.softmax(s, axis=-1)


if __name__ == "__main__":
    B, L, Hd, Hq = 2, 16, 32, 24

    key = jax.random.PRNGKey(0)
    k_x, k_y, k_ws, k_bs, k_we, k_be = jax.random.split(key, 6)

    doc_hiddens = jax.random.normal(k_x, (B, L, Hd), dtype=jnp.float32)
    question_hidden = jax.random.normal(k_y, (B, Hq), dtype=jnp.float32)

    # mask: 1 = padding. Pad the tail of the second batch element.
    x1_mask = jnp.zeros((B, L), dtype=jnp.int32)
    x1_mask = x1_mask.at[1, L - 3:].set(1)

    # nn.Linear(Hq -> Hd) default init scale: U(-1/sqrt(Hq), 1/sqrt(Hq))
    bound = 1.0 / (Hq ** 0.5)
    w_start = jax.random.uniform(k_ws, (Hd, Hq), minval=-bound, maxval=bound, dtype=jnp.float32)
    b_start = jax.random.uniform(k_bs, (Hd,), minval=-bound, maxval=bound, dtype=jnp.float32)
    w_end = jax.random.uniform(k_we, (Hd, Hq), minval=-bound, maxval=bound, dtype=jnp.float32)
    b_end = jax.random.uniform(k_be, (Hd,), minval=-bound, maxval=bound, dtype=jnp.float32)

    start_scores, end_scores = docqa_forward(
        doc_hiddens, question_hidden, x1_mask, w_start, b_start, w_end, b_end)
    jax.block_until_ready((start_scores, end_scores))

    ref_start = _reference(doc_hiddens, question_hidden, x1_mask, w_start, b_start)
    ref_end = _reference(doc_hiddens, question_hidden, x1_mask, w_end, b_end)

    # Exact softmax normalization now; remaining slack only covers MXU-vs-XLA
    # f32 matmul accumulation-order differences.
    assert jnp.allclose(start_scores, ref_start, atol=2e-3, rtol=2e-3)
    assert jnp.allclose(end_scores, ref_end, atol=2e-3, rtol=2e-3)

    print("KERNEL_OK")
</pallas_src>

<mosaic_0001>
module attributes {stable_mosaic.version = 11 : i64} {
  func.func @_docqa_kernel(%arg0: i32, %arg1: memref<2x16x32xf32, #tpu.memory_space<vmem>>, %arg2: memref<2x2x32xf32, #tpu.memory_space<vmem>>, %arg3: memref<2x1x16xi32, #tpu.memory_space<vmem>>, %arg4: memref<2x2x16xf32, #tpu.memory_space<vmem>>) attributes {dimension_semantics = [#tpu.dimension_semantics<parallel>], iteration_bounds = array<i64: 1>, scalar_prefetch = 0 : i64, scratch_operands = 0 : i64, tpu.core_type = #tpu.core_type<tc>, window_params = [{transform_indices = @transform_0, window_bounds = array<i64: 2, 16, 32>}, {transform_indices = @transform_1, window_bounds = array<i64: 2, 2, 32>}, {transform_indices = @transform_2, window_bounds = array<i64: 2, 1, 16>}, {transform_indices = @transform_3, window_bounds = array<i64: 2, 2, 16>}]} {
    %c0 = arith.constant 0 : index
    %c0_0 = arith.constant 0 : index
    %c0_1 = arith.constant 0 : index
    %0 = vector.load %arg1[%c0, %c0_0, %c0_1] : memref<2x16x32xf32, #tpu.memory_space<vmem>>, vector<2x16x32xf32>
    %c0_2 = arith.constant 0 : index
    %c0_3 = arith.constant 0 : index
    %c0_4 = arith.constant 0 : index
    %1 = vector.load %arg2[%c0_2, %c0_3, %c0_4] : memref<2x2x32xf32, #tpu.memory_space<vmem>>, vector<2x2x32xf32>
    %c0_5 = arith.constant 0 : index
    %c0_6 = arith.constant 0 : index
    %c0_7 = arith.constant 0 : index
    %2 = vector.load %arg3[%c0_5, %c0_6, %c0_7] : memref<2x1x16xi32, #tpu.memory_space<vmem>>, vector<2x1x16xi32>
    %c0_i32 = arith.constant 0 : i32
    %3 = vector.broadcast %c0_i32 : i32 to vector<2x1x16xi32>
    %4 = arith.cmpi ne, %2, %3 : vector<2x1x16xi32>
    "tpu.trace_start"() <{level = 10 : i32, message = "bkh,blh->bkl"}> : () -> ()
    %cst = arith.constant dense<0.000000e+00> : vector<2x2x16xf32>
    %5 = tpu.matmul %1, %0, %cst {dimension_numbers = #tpu.dot_dimension_numbers<[2], [2], [1], [1], [0, 0, 0, 1, 1, 1], [0], [0]>} : vector<2x2x32xf32>, vector<2x16x32xf32>, vector<2x2x16xf32> -> vector<2x2x16xf32>
    %cst_8 = arith.constant 0xFF800000 : f32
    "tpu.trace_stop"() : () -> ()
    %6 = vector.shape_cast %4 : vector<2x1x16xi1> to vector<2x1x16xi1>
    %7 = vector.broadcast %6 : vector<2x1x16xi1> to vector<2x2x16xi1>
    %8 = vector.broadcast %cst_8 : f32 to vector<2x2x16xf32>
    %9 = arith.select %7, %8, %5 : vector<2x2x16xi1>, vector<2x2x16xf32>
    %cst_9 = arith.constant dense<0xFF800000> : vector<2x2xf32>
    %10 = vector.multi_reduction <maximumf>, %9, %cst_9 [2] : vector<2x2x16xf32> to vector<2x2xf32>
    %11 = vector.shape_cast %10 : vector<2x2xf32> to vector<2x2x1xf32>
    %12 = vector.broadcast %11 : vector<2x2x1xf32> to vector<2x2x16xf32>
    %13 = arith.subf %9, %12 : vector<2x2x16xf32>
    %14 = math.exp %13 : vector<2x2x16xf32>
    %cst_10 = arith.constant dense<0.000000e+00> : vector<2x2xf32>
    %15 = vector.multi_reduction <add>, %14, %cst_10 [2] : vector<2x2x16xf32> to vector<2x2xf32>
    %16 = vector.shape_cast %15 : vector<2x2xf32> to vector<2x2x1xf32>
    %17 = vector.broadcast %16 : vector<2x2x1xf32> to vector<2x2x16xf32>
    %18 = arith.divf %14, %17 : vector<2x2x16xf32>
    %c0_11 = arith.constant 0 : index
    %c0_12 = arith.constant 0 : index
    %c0_13 = arith.constant 0 : index
    %19 = vector.load %arg4[%c0_11, %c0_12, %c0_13] : memref<2x2x16xf32, #tpu.memory_space<vmem>>, vector<2x2x16xf32>
    tpu.vector_store %arg4[%c0_11, %c0_12, %c0_13], %18 {strides = array<i32>} : memref<2x2x16xf32, #tpu.memory_space<vmem>>, vector<2x2x16xf32>,
    return
  }
  func.func @transform_0(%arg0: i32) -> (i32, i32, i32) {
    %c0_i32 = arith.constant 0 : i32
    %c0_i32_0 = arith.constant 0 : i32
    %c0_i32_1 = arith.constant 0 : i32
    return %arg0, %c0_i32, %c0_i32_0 : i32, i32, i32
  }
  func.func @transform_1(%arg0: i32) -> (i32, i32, i32) {
    %c0_i32 = arith.constant 0 : i32
    %c0_i32_0 = arith.constant 0 : i32
    %c0_i32_1 = arith.constant 0 : i32
    return %arg0, %c0_i32, %c0_i32_0 : i32, i32, i32
  }
  func.func @transform_2(%arg0: i32) -> (i32, i32, i32) {
    %c0_i32 = arith.constant 0 : i32
    %c0_i32_0 = arith.constant 0 : i32
    %c0_i32_1 = arith.constant 0 : i32
    return %arg0, %c0_i32, %c0_i32_0 : i32, i32, i32
  }
  func.func @transform_3(%arg0: i32) -> (i32, i32, i32) {
    %c0_i32 = arith.constant 0 : i32
    %c0_i32_0 = arith.constant 0 : i32
    %c0_i32_1 = arith.constant 0 : i32
    return %arg0, %c0_i32, %c0_i32_0 : i32, i32, i32
  }
}

</mosaic_0001>

<llo_original>
// kernel: tpu_custom_call.1
$region0: #{tpu_custom_call.1}
  #allocation0 [shape = 'u32[]', space=smem, size = 0x4, offset = 0x4, fixed_abs, tag = 'smem constant byte address 0x4 - core index']
  #allocation1 [shape = 'u32[72,128]{1,0:T(1,128)}', space=vmem, size = 0x9000, scoped, tag = 'internal scratch']
  %s0 = inlined_call_operand.hbm [shape: f32[2,16,32], index: 0, kind: input, shape index: {}]
  %s1 = inlined_call_operand.hbm [shape: f32[2,2,32], index: 1, kind: input, shape index: {}]
  %s2 = inlined_call_operand.hbm [shape: s32[2,1,16], index: 2, kind: input, shape index: {}]
  %s3 = inlined_call_operand.hbm [shape: f32[2,2,16], index: 3, kind: output, shape index: {}]
  %s4 = sld [smem:[#allocation0]]
  $region34: #{tpu_custom_call.1} parent=0
    _
  %s6 = ssub.s32 1, %s4
  %s7 = scalar_select 0, %s6, %s4
  $region1: #{tpu_custom_call.1} parent=0
    #allocation2 [shape = 'u8[16384]{0}', space=vmem, size = 0x4000, scoped, tag = 'input window, operand 0, single buffered']
    #allocation3 [shape = 's32[1]{0}', space=sflag, size = 0x4, scoped, tag = 'scoped memory for tpu_custom_call.1']
    #allocation4 [shape = 's32[1]{0}', space=sflag, size = 0x4, scoped, tag = 'scoped memory for tpu_custom_call.1']
    #allocation5 [shape = 'u8[2048]{0}', space=vmem, size = 0x800, scoped, tag = 'input window, operand 1, single buffered']
    #allocation6 [shape = 's32[1]{0}', space=sflag, size = 0x4, scoped, tag = 'scoped memory for tpu_custom_call.1']
    #allocation7 [shape = 'u8[1024]{0}', space=vmem, size = 0x400, scoped, tag = 'input window, operand 2, single buffered']
    #allocation8 [shape = 'u8[2048]{0}', space=vmem, size = 0x800, scoped, tag = 'output window, operand 0, single buffered']
    %8 = vsyncpa [#allocation3], 0
    %9 = vsyncpa [#allocation6], 0
    %10 = vsyncpa [#allocation4], 0
    // Predicated region
    $region2: #{tpu_custom_call.1} parent=1 // pred_check
      _
    $region3: #{tpu_custom_call.1} parent=1 // pred_check_branch
      %12 = sbr.rel (0) target = $region5
    $region4: #{tpu_custom_call.1} parent=1 // pred_region
      %14 = vsyncadd [#allocation3], 0
      %s15 = sshll.u32 %s0, 4
      %s16 = int_to_ptr.hbm [resolvable:$true] %s15
      %s17 = sshll.u32 [#allocation2], 4
      %s18 = int_to_ptr.vmem [resolvable:$true] %s17
      %23 = dma.hbm_to_vmem [thread:$0]  %s16, 512, %s18, [#allocation3], 128, 128, 8
    $region5: #{tpu_custom_call.1} parent=1 // pred_fallthru
      _
    // Predicated region
    $region6: #{tpu_custom_call.1} parent=1 // pred_check
      _
    $region7: #{tpu_custom_call.1} parent=1 // pred_check_branch
      %25 = sbr.rel (0) target = $region9
    $region8: #{tpu_custom_call.1} parent=1 // pred_region
      %27 = vsyncadd [#allocation6], 0
      %s28 = sshll.u32 %s1, 4
      %s29 = int_to_ptr.hbm [resolvable:$true] %s28
      %s30 = sshll.u32 [#allocation5], 4
      %s31 = int_to_ptr.vmem [resolvable:$true] %s30
      %36 = dma.hbm_to_vmem [thread:$0]  %s29, 64, %s31, [#allocation6], 32, 32, 2
    $region9: #{tpu_custom_call.1} parent=1 // pred_fallthru
      _
    // Predicated region
    $region10: #{tpu_custom_call.1} parent=1 // pred_check
      _
    $region11: #{tpu_custom_call.1} parent=1 // pred_check_branch
      %38 = sbr.rel (0) target = $region13
    $region12: #{tpu_custom_call.1} parent=1 // pred_region
      %40 = vsyncadd [#allocation6], 0
      %s41 = sshll.u32 %s2, 4
      %s42 = int_to_ptr.hbm [resolvable:$true] %s41
      %s43 = sshll.u32 [#allocation7], 4
      %s44 = int_to_ptr.vmem [resolvable:$true] %s43
      %49 = dma.hbm_to_vmem [thread:$0]  %s42, 32, %s44, [#allocation6], 16, 16, 1
    $region13: #{tpu_custom_call.1} parent=1 // pred_fallthru
      _
    // Predicated region
    $region14: #{tpu_custom_call.1} parent=1 // pred_check
      _
    $region15: #{tpu_custom_call.1} parent=1 // pred_check_branch
      %51 = sbr.rel (0) target = $region17
    $region16: #{tpu_custom_call.1} parent=1 // pred_region
      %53 = dma.done [#allocation3], 512
    $region17: #{tpu_custom_call.1} parent=1 // pred_fallthru
      _
    // Predicated region
    $region18: #{tpu_custom_call.1} parent=1 // pred_check
      _
    $region19: #{tpu_custom_call.1} parent=1 // pred_check_branch
      %55 = sbr.rel (0) target = $region21
    $region20: #{tpu_custom_call.1} parent=1 // pred_region
      %57 = dma.done [#allocation6], 64
    $region21: #{tpu_custom_call.1} parent=1 // pred_fallthru
      _
    // Predicated region
    $region22: #{tpu_custom_call.1} parent=1 // pred_check
      _
    $region23: #{tpu_custom_call.1} parent=1 // pred_check_branch
      %59 = sbr.rel (0) target = $region25
    $region24: #{tpu_custom_call.1} parent=1 // pred_region
      %61 = dma.done [#allocation6], 32
    $region25: #{tpu_custom_call.1} parent=1 // pred_fallthru
      _
    %v62 = vld [vmem:[#allocation2] sm:$0xff]
    %v63 = vld [vmem:[#allocation2 + $0x8] sm:$0xff]
    %v64 = vld [vmem:[#allocation2 + $0x10] sm:$0xff]
    %v65 = vld [vmem:[#allocation2 + $0x18] sm:$0xff]
    %v66 = vld [vmem:[#allocation5] sm:$0x3]
    %v67 = vld [vmem:[#allocation5 + $0x2] sm:$0x3]
    %v68 = vld [vmem:[#allocation7] sm:$0x1]
    %v69 = vld [vmem:[#allocation7 + $0x1] sm:$0x1]
    %vm70 = vcmp.ne.s32.totalorder %v68, 0
    %vm71 = vcmp.ne.s32.totalorder %v69, 0
    %vm72 = vcmask 261120
    %v74 = vsel %vm72, %v66, 0
    %v77 = vsel %vm72, %v62, 0
    %v80 = vsel %vm72, %v63, 0
    %82 = vmatpush.xpose.msra.mxu0 0.0
    %83 = vmatpush.xpose.msra.mxu0 0.0
    %84 = vmatpush.xpose.msra.mxu0 0.0
    %85 = vmatpush.xpose.msra.mxu0 0.0
    %86 = vmatpush.xpose.msra.mxu0 0.0
    %87 = vmatpush.xpose.msra.mxu0 0.0
    %88 = vmatpush.xpose.msra.mxu0 0.0
    %89 = vmatpush.xpose.msra.mxu0 0.0
    %90 = vmatpush.xpose.msra.mxu0 0.0
    %91 = vmatpush.xpose.msra.mxu0 0.0
    %92 = vmatpush.xpose.msra.mxu0 0.0
    %93 = vmatpush.xpose.msra.mxu0 0.0
    %94 = vmatpush.xpose.msra.mxu0 0.0
    %95 = vmatpush.xpose.msra.mxu0 0.0
    %96 = vmatpush.xpose.msra.mxu0 %v80
    %97 = vmatpush.xpose.msra.mxu0 %v77
    %98 = vmatmul.f32.gmra.mxu0 %v74
    %v99 = vpop.f32.mrf.mxu0
    %v100 = vadd.f32 0.0, %v99
    %101 = vdwg.mxu0
    %v103 = vsel %vm72, %v67, 0
    %v106 = vsel %vm72, %v64, 0
    %v109 = vsel %vm72, %v65, 0
    %111 = vmatpush.xpose.msra.mxu0 0.0
    %112 = vmatpush.xpose.msra.mxu0 0.0
    %113 = vmatpush.xpose.msra.mxu0 0.0
    %114 = vmatpush.xpose.msra.mxu0 0.0
    %115 = vmatpush.xpose.msra.mxu0 0.0
    %116 = vmatpush.xpose.msra.mxu0 0.0
    %117 = vmatpush.xpose.msra.mxu0 0.0
    %118 = vmatpush.xpose.msra.mxu0 0.0
    %119 = vmatpush.xpose.msra.mxu0 0.0
    %120 = vmatpush.xpose.msra.mxu0 0.0
    %121 = vmatpush.xpose.msra.mxu0 0.0
    %122 = vmatpush.xpose.msra.mxu0 0.0
    %123 = vmatpush.xpose.msra.mxu0 0.0
    %124 = vmatpush.xpose.msra.mxu0 0.0
    %125 = vmatpush.xpose.msra.mxu0 %v109
    %126 = vmatpush.xpose.msra.mxu0 %v106
    %127 = vmatmul.f32.gmra.mxu0 %v103
    %v128 = vpop.f32.mrf.mxu0
    %v129 = vadd.f32 0.0, %v128
    %130 = vdwg.mxu0
    %v131 = vsel %vm70, 1, 0
    %v132 = vsel %vm71, 1, 0
    %v133 = vperm.slane %v131, 0
    %v134 = vperm.slane %v132, 0
    %vm135 = vcmp.eq.s32.totalorder %v133, 1
    %vm136 = vcmp.eq.s32.totalorder %v134, 1
    %v137 = vsel %vm135, -inf, %v100
    %v138 = vsel %vm136, -inf, %v129
    %vm139 = vcmask 123904
    %v140 = vsel %vm139, %v137, -inf
    %141 = vmax.xlane.f32.xlu0 %v140
    %v142 = vpop.xlane.xlu0 %141
    %v143 = vsel %vm139, %v138, -inf
    %144 = vmax.xlane.f32.xlu0 %v143
    %v145 = vpop.xlane.xlu0 %144
    %v146 = vsub.f32 %v137, %v142
    %v147 = vsub.f32 %v138, %v145
    %v148 = vmul.f32 %v146, 1.442695
    %v149 = vpow.pop %v148
    %v150 = vmul.f32 %v147, 1.442695
    %v151 = vpow.pop %v150
    %v152 = vsel %vm139, %v149, 0.0
    %153 = vadd.xlane.f32.xlu0 %v152
    %v154 = vpop.xlane.xlu0 %153
    %v155 = vsel %vm139, %v151, 0.0
    %156 = vadd.xlane.f32.xlu0 %v155
    %v157 = vpop.xlane.xlu0 %156
    %v158 = vrcp.pop %v154
    %v159 = vmul.f32 %v154, %v158
    %v160 = vsub.f32 1.0, %v159
    %v161 = vmul.f32 %v158, %v160
    %v162 = vadd.f32 %v158, %v161
    %vm163 = vweird.f32 %v154
    %vm164 = vweird.f32 %v158
    %vm165 = vmor %vm163, %vm164
    %v166 = vsel %vm165, %v158, %v162
    %v167 = vand.u32 2147483647, %v154
    %vm168 = vcmp.eq.f32.partialorder %v167, 8.507059e+37
    %v169 = vand.u32 %v154, 2147483648
    %v170 = vor.u32 1.1754944e-38, %v169
    %v171 = vsel %vm168, %v170, %v166
    %v172 = vmul.f32 %v149, %v171
    %v173 = vrcp.pop %v157
    %v174 = vmul.f32 %v157, %v173
    %v175 = vsub.f32 1.0, %v174
    %v176 = vmul.f32 %v173, %v175
    %v177 = vadd.f32 %v173, %v176
    %vm178 = vweird.f32 %v157
    %vm179 = vweird.f32 %v173
    %vm180 = vmor %vm178, %vm179
    %v181 = vsel %vm180, %v173, %v177
    %v182 = vand.u32 2147483647, %v157
    %vm183 = vcmp.eq.f32.partialorder %v182, 8.507059e+37
    %v184 = vand.u32 %v157, 2147483648
    %v185 = vor.u32 1.1754944e-38, %v184
    %v186 = vsel %vm183, %v185, %v181
    %v187 = vmul.f32 %v151, %v186
    %188 = vst.msk [vmem:[#allocation8] sm:$0x3] %vm139, %v172
    %189 = vst.msk [vmem:[#allocation8 + $0x2] sm:$0x3] %vm139, %v187
    // Predicated region
    $region26: #{tpu_custom_call.1} parent=1 // pred_check
      _
    $region27: #{tpu_custom_call.1} parent=1 // pred_check_branch
      %191 = sbr.rel (0) target = $region29
    $region28: #{tpu_custom_call.1} parent=1 // pred_region
      %193 = vsyncadd [#allocation4], 0
      %s194 = sshll.u32 [#allocation8], 4
      %s195 = int_to_ptr.vmem [resolvable:$true] %s194
      %s196 = sshll.u32 %s3, 4
      %s197 = int_to_ptr.hbm [resolvable:$true] %s196
      %202 = dma.vmem_to_hbm [thread:$0]  %s195, 64, %s197, [#allocation4], 32, 32, 2
    $region29: #{tpu_custom_call.1} parent=1 // pred_fallthru
      _
    // Predicated region
    $region30: #{tpu_custom_call.1} parent=1 // pred_check
      _
    $region31: #{tpu_custom_call.1} parent=1 // pred_check_branch
      %204 = sbr.rel (0) target = $region33
    $region32: #{tpu_custom_call.1} parent=1 // pred_region
      %206 = dma.done [#allocation4], 64
    $region33: #{tpu_custom_call.1} parent=1 // pred_fallthru
      _
    %207 = vsyncpa [#allocation3], 1
    %208 = vsyncpa [#allocation6], 1
    %209 = vsyncpa [#allocation4], 1

</llo_original>
